<compile_context>
chip_gen: v7x
topology: tpu7x:2x2x1
jax: 0.10.0
libtpu: 0.0.40
codegen_flags: <defaults>
</compile_context>

<pallas_src>
import jax
import jax.numpy as jnp
from jax.experimental import pallas as pl
from jax.experimental.pallas import tpu as pltpu

_TILE_BYTES = 2 * 1024 * 1024            # target bytes of `t` per grid step
_RESIDENT_TABLE_BYTES = 6 * 1024 * 1024  # keep cos+sin fully resident below this
_VMEM_LIMIT = 32 * 1024 * 1024           # raise v5e 16MiB default; fits v7x 64MiB


def _rope_kernel(t_ref, cos_ref, sin_ref, o_ref):
    """out = t * cos + rotate_half_interleaved(t) * sin   (sign folded in sin).

    Blocks are (TR, C) lane-dense tiles of the flattened tensor.  The
    interleaved rotate-half uses two XLU lane rotations + a parity select;
    pairs never straddle a row because C is even.
    """
    tr, lanes = t_ref.shape
    if cos_ref.shape[0] == tr:
        # Tables materialized at exactly one tile (resident) or streamed per tile.
        cos = cos_ref[...]
        sin = sin_ref[...]
    else:
        # Full period table resident in VMEM; slice the rows for this tile.
        off = (pl.program_id(0) * tr) % cos_ref.shape[0]
        off = pl.multiple_of(off, 8)
        cos = cos_ref[pl.ds(off, tr), :]
        sin = sin_ref[pl.ds(off, tr), :]

    t = t_ref[...].astype(jnp.float32)
    lane = jax.lax.broadcasted_iota(jnp.int32, t.shape, 1)
    take_next = (lane % 2) == 0
    # jnp.roll semantics: roll(x, s)[i] = x[i - s]
    t_next = pltpu.roll(t, shift=lanes - 1, axis=1)   # t[..., k + 1]
    t_prev = pltpu.roll(t, shift=1, axis=1)           # t[..., k - 1]
    t2 = jnp.where(take_next, t_next, t_prev)
    o_ref[...] = (t * cos + t2 * sin).astype(o_ref.dtype)


def _choose_lane_width(period):
    """Largest lane-dense row width that divides the positional period."""
    for c in (1024, 512, 256, 128):
        if period % c == 0:
            return c
    return period  # fallback (still even because D is even)


def _choose_row_tile(rows, period_rows, target_rows):
    """Largest row tile <= target that divides rows, is sublane-aligned (x8)
    and is commensurate with the cos/sin period (so index maps stay simple)."""
    if rows <= target_rows:
        return rows
    best = None
    d = 1
    while d * d <= rows:
        if rows % d == 0:
            for tr in (d, rows // d):
                if tr > target_rows or tr % 8 != 0:
                    continue
                if tr % period_rows != 0 and period_rows % tr != 0:
                    continue
                if best is None or tr > best:
                    best = tr
        d += 1
    return rows if best is None else best


def _tables(n_pos, dim):
    """f32 cos/sin tables matching SinusoidalPositionEmbedding + the
    [1::2]/[::2] duplication; the rotate-half sign is folded into sin."""
    inv_freq = 1.0 / (10000.0 ** (jnp.arange(0, dim, 2, dtype=jnp.float32) / dim))
    pos = jnp.arange(n_pos, dtype=jnp.float32)
    freqs = pos[:, None] * inv_freq[None, :]          # (n_pos, dim//2)
    cos = jnp.repeat(jnp.cos(freqs), 2, axis=-1)      # [c0,c0,c1,c1,...]
    sin = jnp.repeat(jnp.sin(freqs), 2, axis=-1)      # [s0,s0,s1,s1,...]
    sign = jnp.where(jnp.arange(dim) % 2 == 0, -1.0, 1.0).astype(jnp.float32)
    return cos, sin * sign


def _rope_flat(t_flat, cos_flat, sin_flat, period, out_dtype):
    total = t_flat.shape[0]
    lanes = _choose_lane_width(period)
    period_rows = period // lanes
    rows = total // lanes
    itemsize = jnp.dtype(t_flat.dtype).itemsize
    target_rows = max(1, _TILE_BYTES // (lanes * itemsize))
    tr = _choose_row_tile(rows, period_rows, target_rows)

    t2d = t_flat.reshape(rows, lanes)
    cos2d = cos_flat.reshape(period_rows, lanes)
    sin2d = sin_flat.reshape(period_rows, lanes)

    if tr % period_rows == 0:
        # One t-tile covers >= 1 full positional period: tile the tables up to
        # the tile size, constant index_map -> fetched once, VMEM-resident.
        reps = tr // period_rows
        if reps > 1:
            cos2d = jnp.tile(cos2d, (reps, 1))
            sin2d = jnp.tile(sin2d, (reps, 1))
        tab_block = (tr, lanes)
        tab_map = lambda i: (0, 0)
    elif 2 * period_rows * lanes * 4 <= _RESIDENT_TABLE_BYTES:
        # Full-period tables fit comfortably in VMEM: keep them resident and
        # slice the needed rows inside the kernel (no per-tile re-fetch).
        tab_block = (period_rows, lanes)
        tab_map = lambda i: (0, 0)
    else:
        # Stream the tables with the same row tiling as t.
        nb = period_rows // tr
        tab_block = (tr, lanes)
        tab_map = lambda i: (i % nb, 0)

    grid = (rows // tr,)
    return pl.pallas_call(
        _rope_kernel,
        out_shape=jax.ShapeDtypeStruct((rows, lanes), out_dtype),
        grid_spec=pltpu.PrefetchScalarGridSpec(
            num_scalar_prefetch=0,
            grid=grid,
            in_specs=[
                pl.BlockSpec((tr, lanes), lambda i: (i, 0)),
                pl.BlockSpec(tab_block, tab_map),
                pl.BlockSpec(tab_block, tab_map),
            ],
            out_specs=pl.BlockSpec((tr, lanes), lambda i: (i, 0)),
        ),
        compiler_params=pltpu.CompilerParams(
            dimension_semantics=("parallel",),
            vmem_limit_bytes=_VMEM_LIMIT,
        ),
    )(t2d, cos2d, sin2d)


@jax.jit
def rotary_embedding(t):
    """JAX/Pallas equivalent of RotaryEmbedding.forward(t) (3-D or 4-D t)."""
    # TODO(synk): PyTorch caches pos_emb as a non-persistent buffer; here the
    # (cheap) table build is folded under the same jit as the kernel instead.
    if t.ndim == 4:
        _, m, n, d = t.shape
        cos, sin = _tables(m, d)
        # Position depends on axis 1 (m) and broadcasts over axis 2 (n): build
        # the per-period pattern once (m*n*d elems) instead of transposing t.
        cos_flat = jnp.broadcast_to(cos[:, None, :], (m, n, d)).reshape(-1)
        sin_flat = jnp.broadcast_to(sin[:, None, :], (m, n, d)).reshape(-1)
        period = m * n * d
    elif t.ndim == 3:
        _, s, d = t.shape
        cos, sin = _tables(s, d)
        cos_flat = cos.reshape(-1)
        sin_flat = sin.reshape(-1)
        period = s * d
    else:
        raise ValueError("t must be 3-D or 4-D")
    if d % 2 != 0:
        raise ValueError("rotary dim must be even")
    out2d = _rope_flat(t.reshape(-1), cos_flat, sin_flat, period, t.dtype)
    return out2d.reshape(t.shape)


def _reference(t):
    """Pure-JAX replica of the PyTorch forward for verification."""
    n, d = t.shape[1], t.shape[-1]
    inv_freq = 1.0 / (10000.0 ** (jnp.arange(0, d, 2, dtype=jnp.float32) / d))
    pos = jnp.arange(n, dtype=jnp.float32)
    freqs = pos[:, None] * inv_freq[None, :]
    cos_pos = jnp.repeat(jnp.cos(freqs), 2, axis=-1)
    sin_pos = jnp.repeat(jnp.sin(freqs), 2, axis=-1)
    if t.ndim == 4:
        cos_pos = cos_pos[:, None, :]
        sin_pos = sin_pos[:, None, :]
    t2 = jnp.stack([-t[..., 1::2], t[..., ::2]], axis=-1).reshape(t.shape)
    return (t * cos_pos + t2 * sin_pos).astype(t.dtype)


if __name__ == "__main__":
    key = jax.random.PRNGKey(0)
    k3, k4 = jax.random.split(key)

    # 3-D branch: (batch=2, seq=8, dim=32)
    t3 = jax.random.normal(k3, (2, 8, 32), dtype=jnp.float32)
    out3 = jax.block_until_ready(rotary_embedding(t3))
    ref3 = _reference(t3)
    assert out3.shape == t3.shape and out3.dtype == t3.dtype
    assert jnp.allclose(out3, ref3, atol=1e-5, rtol=1e-5)

    # 4-D branch: (batch=2, m=8, n=4, dim=32)
    t4 = jax.random.normal(k4, (2, 8, 4, 32), dtype=jnp.float32)
    out4 = jax.block_until_ready(rotary_embedding(t4))
    ref4 = _reference(t4)
    assert out4.shape == t4.shape and out4.dtype == t4.dtype
    assert jnp.allclose(out4, ref4, atol=1e-5, rtol=1e-5)

    print("KERNEL_OK")
</pallas_src>

<mosaic_0001>
module attributes {stable_mosaic.version = 11 : i64} {
  func.func @_rope_kernel(%arg0: i32, %arg1: memref<2x256xf32, #tpu.memory_space<vmem>>, %arg2: memref<2x256xf32, #tpu.memory_space<vmem>>, %arg3: memref<2x256xf32, #tpu.memory_space<vmem>>, %arg4: memref<2x256xf32, #tpu.memory_space<vmem>>) attributes {dimension_semantics = [#tpu.dimension_semantics<parallel>], iteration_bounds = array<i64: 1>, scalar_prefetch = 0 : i64, scratch_operands = 0 : i64, tpu.core_type = #tpu.core_type<tc>, window_params = [{transform_indices = @transform_0, window_bounds = array<i64: 2, 256>}, {pipeline_mode = #tpu.pipeline_mode<synchronous>, transform_indices = @transform_1, window_bounds = array<i64: 2, 256>}, {pipeline_mode = #tpu.pipeline_mode<synchronous>, transform_indices = @transform_2, window_bounds = array<i64: 2, 256>}, {transform_indices = @transform_3, window_bounds = array<i64: 2, 256>}]} {
    %c0 = arith.constant 0 : index
    %c0_0 = arith.constant 0 : index
    %0 = vector.load %arg2[%c0, %c0_0] : memref<2x256xf32, #tpu.memory_space<vmem>>, vector<2x256xf32>
    %c0_1 = arith.constant 0 : index
    %c0_2 = arith.constant 0 : index
    %1 = vector.load %arg3[%c0_1, %c0_2] : memref<2x256xf32, #tpu.memory_space<vmem>>, vector<2x256xf32>
    %c0_3 = arith.constant 0 : index
    %c0_4 = arith.constant 0 : index
    %2 = vector.load %arg1[%c0_3, %c0_4] : memref<2x256xf32, #tpu.memory_space<vmem>>, vector<2x256xf32>
    %3 = tpu.iota {dimensions = array<i32: 1>} : vector<2x256xi32>
    %c2_i32 = arith.constant 2 : i32
    %c0_i32 = arith.constant 0 : i32
    %4 = arith.cmpi eq, %c2_i32, %c0_i32 : i32
    %c1_i32 = arith.constant 1 : i32
    %5 = arith.select %4, %c1_i32, %c2_i32 : i32
    %6 = vector.broadcast %5 : i32 to vector<2x256xi32>
    %7 = arith.remsi %3, %6 : vector<2x256xi32>
    %c0_i32_5 = arith.constant 0 : i32
    %8 = vector.broadcast %c0_i32_5 : i32 to vector<2x256xi32>
    %9 = arith.cmpi ne, %7, %8 : vector<2x256xi32>
    %c0_i32_6 = arith.constant 0 : i32
    %10 = vector.broadcast %c0_i32_6 : i32 to vector<2x256xi32>
    %11 = arith.cmpi slt, %7, %10 : vector<2x256xi32>
    %c0_i32_7 = arith.constant 0 : i32
    %12 = arith.cmpi slt, %5, %c0_i32_7 : i32
    %13 = vector.broadcast %12 : i1 to vector<2x256xi1>
    %14 = vector.broadcast %13 : vector<2x256xi1> to vector<2x256xi1>
    %15 = arith.xori %11, %14 : vector<2x256xi1>
    %16 = arith.andi %15, %9 : vector<2x256xi1>
    %17 = vector.broadcast %5 : i32 to vector<2x256xi32>
    %18 = arith.addi %7, %17 : vector<2x256xi32>
    %19 = arith.select %16, %18, %7 : vector<2x256xi1>, vector<2x256xi32>
    %c0_i32_8 = arith.constant 0 : i32
    %20 = vector.broadcast %c0_i32_8 : i32 to vector<2x256xi32>
    %21 = arith.cmpi eq, %19, %20 : vector<2x256xi32>
    %c255_i32 = arith.constant 255 : i32
    %22 = tpu.dynamic_rotate %2 by %c255_i32 dim 1 : vector<2x256xf32>, i32 -> vector<2x256xf32>
    %c1_i32_9 = arith.constant 1 : i32
    %23 = tpu.dynamic_rotate %2 by %c1_i32_9 dim 1 : vector<2x256xf32>, i32 -> vector<2x256xf32>
    %24 = arith.select %21, %22, %23 : vector<2x256xi1>, vector<2x256xf32>
    %25 = arith.mulf %2, %0 : vector<2x256xf32>
    %26 = arith.mulf %24, %1 : vector<2x256xf32>
    %27 = arith.addf %25, %26 : vector<2x256xf32>
    %c0_10 = arith.constant 0 : index
    %c0_11 = arith.constant 0 : index
    %28 = vector.load %arg4[%c0_10, %c0_11] : memref<2x256xf32, #tpu.memory_space<vmem>>, vector<2x256xf32>
    tpu.vector_store %arg4[%c0_10, %c0_11], %27 {strides = array<i32>} : memref<2x256xf32, #tpu.memory_space<vmem>>, vector<2x256xf32>,
    return
  }
  func.func @transform_0(%arg0: i32) -> (i32, i32) {
    %c0_i32 = arith.constant 0 : i32
    %c0_i32_0 = arith.constant 0 : i32
    return %arg0, %c0_i32 : i32, i32
  }
  func.func @transform_1(%arg0: i32) -> (i32, i32) {
    %c0_i32 = arith.constant 0 : i32
    %c0_i32_0 = arith.constant 0 : i32
    %c0_i32_1 = arith.constant 0 : i32
    return %c0_i32, %c0_i32_0 : i32, i32
  }
  func.func @transform_2(%arg0: i32) -> (i32, i32) {
    %c0_i32 = arith.constant 0 : i32
    %c0_i32_0 = arith.constant 0 : i32
    %c0_i32_1 = arith.constant 0 : i32
    return %c0_i32, %c0_i32_0 : i32, i32
  }
  func.func @transform_3(%arg0: i32) -> (i32, i32) {
    %c0_i32 = arith.constant 0 : i32
    %c0_i32_0 = arith.constant 0 : i32
    return %arg0, %c0_i32 : i32, i32
  }
}

</mosaic_0001>

<llo_original>
// kernel: mul.4
$region0: #{mul.4}
  #allocation0 [shape = 's32[1]{0}', space=sflag, size = 0x4, scoped, tag = 'scoped memory for mul.4']
  %s0 = inlined_call_operand.vmem [shape: f32[256], index: 0, kind: input, shape index: {}]
  %s1 = inlined_call_operand.vmem [shape: f32[256], index: 1, kind: input, shape index: {}]
  %s2 = inlined_call_operand.vmem [shape: f32[256], index: 2, kind: output, shape index: {}]
  %v3 = vld [vmem:[%s0] sm:$0x3]
  %v4 = vld [vmem:[%s1] sm:$0x3]
  %5 = xla_tuple %v3, %v4
  %6 = xla_tuple %5
  %v7 = vmul.f32 %v3, %v4
  %8 = xla_tuple %v7
  %9 = vst [vmem:[%s2] sm:$0x3] %v7

// kernel: rotary_embedding.1
$region0: #{rotary_embedding.1}
  #allocation0 [shape = 'u32[]', space=smem, size = 0x4, offset = 0x4, fixed_abs, tag = 'smem constant byte address 0x4 - core index']
  #allocation1 [shape = 'u32[144,128]{1,0:T(1,128)}', space=vmem, size = 0x12000, scoped, tag = 'internal scratch']
  %s0 = inlined_call_operand.vmem [shape: f32[2,256], index: 0, kind: input, shape index: {}]
  %s1 = inlined_call_operand.vmem [shape: f32[2,256], index: 1, kind: input, shape index: {}]
  %s2 = inlined_call_operand.vmem [shape: f32[2,256], index: 2, kind: input, shape index: {}]
  %s3 = inlined_call_operand.vmem [shape: f32[2,256], index: 3, kind: output, shape index: {}]
  %s4 = sld [smem:[#allocation0]]
  $region22: #{rotary_embedding.1} parent=0
    _
  %s6 = ssub.s32 1, %s4
  %s7 = scalar_select 0, %s6, %s4
  // Predicated region
  $region2: #{rotary_embedding.1} parent=0 // pred_check
    _
  $region3: #{rotary_embedding.1} parent=0 // pred_check_branch
    %9 = sbr.rel (0) target = $region5
  $region4: #{rotary_embedding.1} parent=0 // pred_region
    _
  $region5: #{rotary_embedding.1} parent=0 // pred_fallthru
    _
  // Predicated region
  $region6: #{rotary_embedding.1} parent=0 // pred_check
    _
  $region7: #{rotary_embedding.1} parent=0 // pred_check_branch
    %11 = sbr.rel (0) target = $region9
  $region8: #{rotary_embedding.1} parent=0 // pred_region
    _
  $region9: #{rotary_embedding.1} parent=0 // pred_fallthru
    _
  // Predicated region
  $region10: #{rotary_embedding.1} parent=0 // pred_check
    _
  $region11: #{rotary_embedding.1} parent=0 // pred_check_branch
    %13 = sbr.rel (0) target = $region13
  $region12: #{rotary_embedding.1} parent=0 // pred_region
    _
  $region13: #{rotary_embedding.1} parent=0 // pred_fallthru
    _
  %v14 = vld [vmem:[%s1] sm:$0xf]
  %v15 = vld [vmem:[%s2] sm:$0xf]
  %v16 = vld [vmem:[%s0] sm:$0xf]
  %v17 = vlaneseq
  %v18 = vand.u32 %v17, 127
  %v19 = vadd.s32 %v18, 128
  %vm20 = vcmp.lt.s32.totalorder %v18, 0
  %v21 = vsub.s32 0, %v18
  %v22 = vsel %vm20, %v21, %v18
  %v23 = vshrl.u32 %v22, 1
  %v24 = vand.u32 %v22, 1
  %v25 = vsub.s32 0, %v24
  %v26 = vsel %vm20, %v25, %v24
  %vm27 = vcmp.lt.s32.totalorder %v19, 0
  %v28 = vsub.s32 0, %v19
  %v29 = vsel %vm27, %v28, %v19
  %v30 = vshrl.u32 %v29, 1
  %v31 = vand.u32 %v29, 1
  %v32 = vsub.s32 0, %v31
  %v33 = vsel %vm27, %v32, %v31
  %vm34 = vcmp.ne.s32.totalorder %v26, 0
  %vm35 = vcmp.ne.s32.totalorder %v33, 0
  %vm36 = vcmp.lt.s32.totalorder %v26, 0
  %vm37 = vcmp.lt.s32.totalorder %v33, 0
  %vm38 = vmand %vm36, %vm34
  %vm39 = vmand %vm37, %vm35
  %v40 = vadd.s32 %v26, 2
  %v41 = vadd.s32 %v33, 2
  %v42 = vsel %vm38, %v40, %v26
  %v43 = vsel %vm39, %v41, %v33
  %vm44 = vcmp.eq.s32.totalorder %v42, 0
  %vm45 = vcmp.eq.s32.totalorder %v43, 0
  %v48 = vunpack.c.l.s4 1983009808
  %v49 = vunpack.c.0.s8 %v48
  %v50 = vlaneseq
  %v51 = vshrl.u32 %v50, 7
  %v52 = vsub.s32 %v49, %v51
  %v53 = vrot.slane %v16, %v52
  %v54 = vcombine.high %v53, %v53
  %57 = vrot.lane.b32.xlu0 %v53, 127
  %v58 = vpop.permute.xlu0 %57
  %59 = vrot.lane.b32.xlu0 %v54, 127
  %v60 = vpop.permute.xlu0 %59
  %vm61 = vcmp.lt.s32.totalorder %v18, 127
  %v62 = vsel %vm61, %v58, %v60
  %v63 = vsel %vm61, %v60, %v58
  %64 = vrot.lane.b32.xlu0 %v53, 1
  %v65 = vpop.permute.xlu0 %64
  %66 = vrot.lane.b32.xlu0 %v54, 1
  %v67 = vpop.permute.xlu0 %66
  %vm68 = vcmp.lt.s32.totalorder %v18, 1
  %v69 = vsel %vm68, %v65, %v67
  %v70 = vsel %vm68, %v67, %v65
  %v71 = vsel %vm44, %v62, %v70
  %v72 = vsel %vm45, %v63, %v69
  %v73 = vmul.f32 %v16, %v14
  %v76 = vunpack.c.l.s4 1983009808
  %v77 = vunpack.c.0.s8 %v76
  %v78 = vlaneseq
  %v79 = vshrl.u32 %v78, 7
  %v80 = vsub.s32 %v77, %v79
  %v81 = vrot.slane %v15, %v80
  %v82 = vcombine.high %v81, %v81
  %v85 = vmul.f32 %v71, %v81
  %v86 = vmul.f32 %v72, %v82
  %v89 = vcombine.low %v85, %v86
  %v91 = vunpack.c.l.s4 1983009808
  %v92 = vunpack.c.0.s8 %v91
  %v93 = vlaneseq
  %v94 = vshrl.u32 %v93, 7
  %v95 = vsub.s32 %v92, %v94
  %v96 = vrot.slane %v89, %v95
  %v98 = vadd.f32 %v73, %v96
  %99 = vst [vmem:[%s3] sm:$0xf] %v98
  // Predicated region
  $region14: #{rotary_embedding.1} parent=0 // pred_check
    _
  $region15: #{rotary_embedding.1} parent=0 // pred_check_branch
    %101 = sbr.rel (0) target = $region17
  $region16: #{rotary_embedding.1} parent=0 // pred_region
    _
  $region17: #{rotary_embedding.1} parent=0 // pred_fallthru
    _
  // Predicated region
  $region18: #{rotary_embedding.1} parent=0 // pred_check
    _
  $region19: #{rotary_embedding.1} parent=0 // pred_check_branch
    %103 = sbr.rel (0) target = $region21
  $region20: #{rotary_embedding.1} parent=0 // pred_region
    _
  $region21: #{rotary_embedding.1} parent=0 // pred_fallthru
    _

</llo_original>
